<compile_context>
chip_gen: v7x
topology: tpu7x:2x2x1
jax: 0.10.0
libtpu: 0.0.40
codegen_flags: <defaults>
</compile_context>

<pallas_src>
import functools

import jax
import jax.numpy as jnp
from jax.experimental import pallas as pl
from jax.experimental.pallas import tpu as pltpu


def _conv_stats_kernel(p_ref, w_ref, out_ref, stats_ref):
    """One (tm, K) x (K, Cout) im2col matmul tile + BN-stat partials.

    p_ref:     (tm, K)    bf16 im2col patches
    w_ref:     (K, Cout)  bf16 flattened conv weight
    out_ref:   (tm, Cout) bf16 conv activation tile
    stats_ref: (2, Cout)  f32 per-block [sum; sum of squares] partials
    """
    acc = jnp.dot(p_ref[...], w_ref[...], preferred_element_type=jnp.float32)
    out_ref[...] = acc.astype(out_ref.dtype)
    # Per-block partials: no state carried across grid steps -> grid stays
    # 'parallel' (reduced to full batch statistics in the wrapper, tiny).
    stats_ref[0:1, :] = jnp.sum(acc, axis=0, keepdims=True)
    stats_ref[1:2, :] = jnp.sum(acc * acc, axis=0, keepdims=True)


def _norm_relu_pool_kernel(x_ref, scale_ref, shift_ref, o_ref):
    """Fused BatchNorm affine + 2x2 max-pool + ReLU.

    x_ref:     (rbp, 2, Wp, 2, Cout) bf16 -- free view of the conv activation,
               axes = (pooled row, row-in-window, pooled col, col-in-window, C)
    scale_ref: (1, Cout) f32
    shift_ref: (1, Cout) f32
    o_ref:     (rbp, Wp, Cout) f32
    """
    x = x_ref[...].astype(jnp.float32)
    y = x * scale_ref[...] + shift_ref[...]     # broadcast (1, Cout) over window
    y = jnp.max(y, axis=1)                      # height pool -> (rbp, Wp, 2, Cout)
    y = jnp.max(y, axis=2)                      # width pool  -> (rbp, Wp, Cout)
    # ReLU commutes with max (monotone), so apply it once on the pooled result.
    o_ref[...] = jnp.maximum(y, 0.0).astype(o_ref.dtype)


def _largest_divisor_at_most(n, cap):
    d = max(1, min(n, cap))
    while n % d:
        d -= 1
    return d


def downsample_rgb(x_nchw, weight, bias, gamma, beta, eps=1e-5):
    """Conv2d(3,C,7,s=2,p=3) -> BatchNorm2d (training) -> ReLU -> MaxPool2d(2,2)."""
    B, Cin, H, W = x_nchw.shape
    Cout, _, KH, KW = weight.shape
    stride, pad = 2, 3
    Ho = (H + 2 * pad - KH) // stride + 1
    Wo = (W + 2 * pad - KW) // stride + 1
    assert Ho % 2 == 0 and Wo % 2 == 0, "2x2 max-pool path expects even conv output"
    Hp, Wp = Ho // 2, Wo // 2

    # Training-mode BatchNorm subtracts the batch mean, which cancels the conv
    # bias exactly, so it never needs to be added (review: fold bias into BN).
    del bias

    # ---- glue: im2col in bf16 (halves the dominant stage-1 HBM read) --------
    # TODO(synk): pull the 7x7 window gather into the kernel (overlapping-row
    # BlockSpec / manual DMA) to remove the im2col byte blowup entirely.
    x = jnp.transpose(x_nchw, (0, 2, 3, 1)).astype(jnp.bfloat16)        # NHWC
    xp = jnp.pad(x, ((0, 0), (pad, pad), (pad, pad), (0, 0)))
    slabs = []
    for kh in range(KH):
        for kw in range(KW):
            slabs.append(
                xp[:, kh:kh + stride * Ho:stride, kw:kw + stride * Wo:stride, :])
    patches = jnp.concatenate(slabs, axis=-1)            # (B, Ho, Wo, KH*KW*Cin)
    K = KH * KW * Cin
    M = B * Ho * Wo
    patches = patches.reshape(M, K)

    # weight flattened to the (kh, kw, cin) ordering of the patches
    w_mat = (jnp.transpose(weight, (2, 3, 1, 0))
             .reshape(K, Cout).astype(jnp.bfloat16))

    # ---- stage 1: conv matmul + per-block BN-stat partials -------------------
    tm = 1024 if M >= 1024 else ((M + 7) // 8) * 8
    M_pad = ((M + tm - 1) // tm) * tm
    if M_pad != M:
        # Zero rows contribute nothing to sum / sumsq (there is no bias), so the
        # batch statistics stay exact as long as we divide by the true M below.
        patches = jnp.pad(patches, ((0, M_pad - M), (0, 0)))
    G = M_pad // tm

    conv_out, stats = pl.pallas_call(
        _conv_stats_kernel,
        out_shape=(
            jax.ShapeDtypeStruct((M_pad, Cout), jnp.bfloat16),
            jax.ShapeDtypeStruct((G, 2, Cout), jnp.float32),
        ),
        grid_spec=pltpu.PrefetchScalarGridSpec(
            num_scalar_prefetch=0,
            grid=(G,),
            in_specs=[
                pl.BlockSpec((tm, K), lambda i: (i, 0)),
                pl.BlockSpec((K, Cout), lambda i: (0, 0)),
            ],
            out_specs=(
                pl.BlockSpec((tm, Cout), lambda i: (i, 0)),
                pl.BlockSpec((None, 2, Cout), lambda i: (i, 0, 0)),
            ),
        ),
        compiler_params=pltpu.CompilerParams(
            dimension_semantics=("parallel",)),
    )(patches, w_mat)

    # ---- BatchNorm (training mode) statistics -> affine scale / shift -------
    csum = jnp.sum(stats[:, 0, :], axis=0)                 # (Cout,)
    csq = jnp.sum(stats[:, 1, :], axis=0)                  # (Cout,)
    mean = csum / M
    var = jnp.maximum(csq / M - mean * mean, 0.0)          # biased variance
    scale = (gamma / jnp.sqrt(var + eps)).astype(jnp.float32)
    shift = (beta - mean * scale).astype(jnp.float32)
    scale2 = scale.reshape(1, Cout)
    shift2 = shift.reshape(1, Cout)

    # Free (contiguous) view of the conv activation exposing the 2x2 pooling
    # window as explicit axes -- replaces the old HBM transpose copy.
    conv5 = conv_out[:M].reshape(B * Hp, 2, Wp, 2, Cout)

    # ---- stage 2: fused normalize + 2x2 max-pool + ReLU ----------------------
    rows_p = B * Hp
    cap = max(1, (1 << 20) // (2 * Wo * Cout * 2))     # ~1 MiB of input per block
    rbp = _largest_divisor_at_most(rows_p, cap)
    G2 = rows_p // rbp

    pooled = pl.pallas_call(
        _norm_relu_pool_kernel,
        out_shape=jax.ShapeDtypeStruct((rows_p, Wp, Cout), jnp.float32),
        grid_spec=pltpu.PrefetchScalarGridSpec(
            num_scalar_prefetch=0,
            grid=(G2,),
            in_specs=[
                pl.BlockSpec((rbp, 2, Wp, 2, Cout), lambda i: (i, 0, 0, 0, 0)),
                pl.BlockSpec((1, Cout), lambda i: (0, 0)),
                pl.BlockSpec((1, Cout), lambda i: (0, 0)),
            ],
            out_specs=pl.BlockSpec((rbp, Wp, Cout), lambda i: (i, 0, 0)),
        ),
        compiler_params=pltpu.CompilerParams(
            dimension_semantics=("parallel",)),
    )(conv5, scale2, shift2)

    out = pooled.reshape(B, Hp, Wp, Cout)
    return jnp.transpose(out, (0, 3, 1, 2))                # NCHW, matches PyTorch


if __name__ == "__main__":
    key = jax.random.PRNGKey(0)
    k1, k2, k3 = jax.random.split(key, 3)

    B, Cin, H, W = 2, 3, 16, 16
    out_dim = 128     # multiple of 128 -> fully lane-dense conv stores / stage-2 lanes

    x = jax.random.normal(k1, (B, Cin, H, W), dtype=jnp.float32)
    weight = jax.random.normal(k2, (out_dim, Cin, 7, 7), dtype=jnp.float32) * 0.05
    bias = jax.random.normal(k3, (out_dim,), dtype=jnp.float32) * 0.05
    gamma = jnp.ones((out_dim,), dtype=jnp.float32)    # BatchNorm2d default init
    beta = jnp.zeros((out_dim,), dtype=jnp.float32)

    out = downsample_rgb(x, weight, bias, gamma, beta)
    jax.block_until_ready(out)
    assert out.shape == (B, out_dim, H // 4, W // 4), out.shape
    print("KERNEL_OK")
</pallas_src>

<mosaic_0001>
module attributes {stable_mosaic.version = 11 : i64} {
  func.func @_conv_stats_kernel(%arg0: i32, %arg1: memref<128x147xbf16, #tpu.memory_space<vmem>>, %arg2: memref<147x128xbf16, #tpu.memory_space<vmem>>, %arg3: memref<128x128xbf16, #tpu.memory_space<vmem>>, %arg4: memref<1x2x128xf32, #tpu.memory_space<vmem>>) attributes {dimension_semantics = [#tpu.dimension_semantics<parallel>], iteration_bounds = array<i64: 1>, scalar_prefetch = 0 : i64, scratch_operands = 0 : i64, tpu.core_type = #tpu.core_type<tc>, window_params = [{transform_indices = @transform_0, window_bounds = array<i64: 128, 147>}, {pipeline_mode = #tpu.pipeline_mode<synchronous>, transform_indices = @transform_1, window_bounds = array<i64: 147, 128>}, {transform_indices = @transform_2, window_bounds = array<i64: 128, 128>}, {transform_indices = @transform_3, window_bounds = array<i64: 1, 2, 128>}]} {
    %c0 = arith.constant 0 : index
    %c0_0 = arith.constant 0 : index
    %0 = vector.load %arg1[%c0, %c0_0] : memref<128x147xbf16, #tpu.memory_space<vmem>>, vector<128x147xbf16>
    %c0_1 = arith.constant 0 : index
    %c0_2 = arith.constant 0 : index
    %1 = vector.load %arg2[%c0_1, %c0_2] : memref<147x128xbf16, #tpu.memory_space<vmem>>, vector<147x128xbf16>
    %cst = arith.constant dense<0.000000e+00> : vector<128x128xf32>
    %2 = tpu.matmul %0, %1, %cst {dimension_numbers = #tpu.dot_dimension_numbers<[1], [0], [0], [1], [0, 0, 1, 1], [], []>} : vector<128x147xbf16>, vector<147x128xbf16>, vector<128x128xf32> -> vector<128x128xf32>
    %3 = arith.truncf %2 : vector<128x128xf32> to vector<128x128xbf16>
    %c0_3 = arith.constant 0 : index
    %c0_4 = arith.constant 0 : index
    %4 = vector.load %arg3[%c0_3, %c0_4] : memref<128x128xbf16, #tpu.memory_space<vmem>>, vector<128x128xbf16>
    tpu.vector_store %arg3[%c0_3, %c0_4], %3 {strides = array<i32>} : memref<128x128xbf16, #tpu.memory_space<vmem>>, vector<128x128xbf16>,
    %cst_5 = arith.constant dense<0.000000e+00> : vector<128xf32>
    %5 = vector.multi_reduction <add>, %2, %cst_5 [0] : vector<128x128xf32> to vector<128xf32>
    %6 = vector.shape_cast %5 : vector<128xf32> to vector<1x128xf32>
    %c0_6 = arith.constant 0 : index
    %c0_7 = arith.constant 0 : index
    %c0_8 = arith.constant 0 : index
    %7 = vector.load %arg4[%c0_6, %c0_7, %c0_8] : memref<1x2x128xf32, #tpu.memory_space<vmem>>, vector<1x1x128xf32>
    %8 = vector.shape_cast %7 : vector<1x1x128xf32> to vector<1x128xf32>
    %9 = vector.shape_cast %6 : vector<1x128xf32> to vector<1x1x128xf32>
    tpu.vector_store %arg4[%c0_6, %c0_7, %c0_8], %9 {strides = array<i32>} : memref<1x2x128xf32, #tpu.memory_space<vmem>>, vector<1x1x128xf32>,
    %10 = arith.mulf %2, %2 : vector<128x128xf32>
    %cst_9 = arith.constant dense<0.000000e+00> : vector<128xf32>
    %11 = vector.multi_reduction <add>, %10, %cst_9 [0] : vector<128x128xf32> to vector<128xf32>
    %12 = vector.shape_cast %11 : vector<128xf32> to vector<1x128xf32>
    %c0_10 = arith.constant 0 : index
    %c1 = arith.constant 1 : index
    %c0_11 = arith.constant 0 : index
    %13 = vector.load %arg4[%c0_10, %c1, %c0_11] : memref<1x2x128xf32, #tpu.memory_space<vmem>>, vector<1x1x128xf32>
    %14 = vector.shape_cast %13 : vector<1x1x128xf32> to vector<1x128xf32>
    %15 = vector.shape_cast %12 : vector<1x128xf32> to vector<1x1x128xf32>
    tpu.vector_store %arg4[%c0_10, %c1, %c0_11], %15 {strides = array<i32>} : memref<1x2x128xf32, #tpu.memory_space<vmem>>, vector<1x1x128xf32>,
    return
  }
  func.func @transform_0(%arg0: i32) -> (i32, i32) {
    %c0_i32 = arith.constant 0 : i32
    %c0_i32_0 = arith.constant 0 : i32
    return %arg0, %c0_i32 : i32, i32
  }
  func.func @transform_1(%arg0: i32) -> (i32, i32) {
    %c0_i32 = arith.constant 0 : i32
    %c0_i32_0 = arith.constant 0 : i32
    %c0_i32_1 = arith.constant 0 : i32
    return %c0_i32, %c0_i32_0 : i32, i32
  }
  func.func @transform_2(%arg0: i32) -> (i32, i32) {
    %c0_i32 = arith.constant 0 : i32
    %c0_i32_0 = arith.constant 0 : i32
    return %arg0, %c0_i32 : i32, i32
  }
  func.func @transform_3(%arg0: i32) -> (i32, i32, i32) {
    %c0_i32 = arith.constant 0 : i32
    %c0_i32_0 = arith.constant 0 : i32
    %c0_i32_1 = arith.constant 0 : i32
    return %arg0, %c0_i32, %c0_i32_0 : i32, i32, i32
  }
}

</mosaic_0001>

<llo_original>
// kernel: tpu_custom_call.1
$region0: #{tpu_custom_call.1}
  #allocation0 [shape = 'u32[]', space=smem, size = 0x4, offset = 0x4, fixed_abs, tag = 'smem constant byte address 0x4 - core index']
  #allocation1 [shape = 'u32[144,128]{1,0:T(1,128)}', space=vmem, size = 0x12000, scoped, tag = 'internal scratch']
  %s0 = inlined_call_operand.vmem [shape: bf16[128,147], index: 0, kind: input, shape index: {}]
  %s1 = inlined_call_operand.vmem [shape: bf16[147,128], index: 1, kind: input, shape index: {}]
  %s2 = inlined_call_operand.hbm [shape: bf16[128,128], index: 2, kind: output, shape index: {0}]
  %s3 = inlined_call_operand.hbm [shape: f32[1,2,128], index: 3, kind: output, shape index: {1}]
  %4 = xla_tuple %s2, %s3
  %s5 = sld [smem:[#allocation0]]
  $region26: #{tpu_custom_call.1} parent=0
    _
  %s7 = ssub.s32 1, %s5
  %s8 = scalar_select 0, %s7, %s5
  $region1: #{tpu_custom_call.1} parent=0
    #allocation2 [shape = 'u8[32768]{0}', space=vmem, size = 0x8000, scoped, tag = 'output window, operand 0, single buffered']
    #allocation3 [shape = 's32[1]{0}', space=sflag, size = 0x4, scoped, tag = 'scoped memory for tpu_custom_call.1']
    #allocation4 [shape = 'u8[1024]{0}', space=vmem, size = 0x400, scoped, tag = 'output window, operand 1, single buffered']
    #allocation5 [shape = 's32[1]{0}', space=sflag, size = 0x4, scoped, tag = 'scoped memory for tpu_custom_call.1']
    %9 = vsyncpa [#allocation3], 0
    %10 = vsyncpa [#allocation5], 0
    // Predicated region
    $region2: #{tpu_custom_call.1} parent=1 // pred_check
      _
    $region3: #{tpu_custom_call.1} parent=1 // pred_check_branch
      %12 = sbr.rel (0) target = $region5
    $region4: #{tpu_custom_call.1} parent=1 // pred_region
      _
    $region5: #{tpu_custom_call.1} parent=1 // pred_fallthru
      _
    // Predicated region
    $region6: #{tpu_custom_call.1} parent=1 // pred_check
      _
    $region7: #{tpu_custom_call.1} parent=1 // pred_check_branch
      %14 = sbr.rel (0) target = $region9
    $region8: #{tpu_custom_call.1} parent=1 // pred_region
      _
    $region9: #{tpu_custom_call.1} parent=1 // pred_fallthru
      _
    %v16 = vld [vmem:[%s0] sm:$0xff]
    %v17 = vld [vmem:[%s0 + $0x8] sm:$0xff]
    %v18 = vld [vmem:[%s0 + $0x10] sm:$0xff]
    %v19 = vld [vmem:[%s0 + $0x18] sm:$0xff]
    %v20 = vld [vmem:[%s0 + $0x20] sm:$0xff]
    %v21 = vld [vmem:[%s0 + $0x28] sm:$0xff]
    %v22 = vld [vmem:[%s0 + $0x30] sm:$0xff]
    %v23 = vld [vmem:[%s0 + $0x38] sm:$0xff]
    %v24 = vld [vmem:[%s0 + $0x40] sm:$0xff]
    %v25 = vld [vmem:[%s0 + $0x48] sm:$0xff]
    %v26 = vld [vmem:[%s0 + $0x50] sm:$0xff]
    %v27 = vld [vmem:[%s0 + $0x58] sm:$0xff]
    %v28 = vld [vmem:[%s0 + $0x60] sm:$0xff]
    %v29 = vld [vmem:[%s0 + $0x68] sm:$0xff]
    %v30 = vld [vmem:[%s0 + $0x70] sm:$0xff]
    %v31 = vld [vmem:[%s0 + $0x78] sm:$0xff]
    %v32 = vld [vmem:[%s1] sm:$0xf]
    %v33 = vld [vmem:[%s1 + $0x4] sm:$0xf]
    %v34 = vld [vmem:[%s1 + $0x8] sm:$0xf]
    %v35 = vld [vmem:[%s1 + $0xc] sm:$0xf]
    %v36 = vld [vmem:[%s1 + $0x10] sm:$0xf]
    %v37 = vld [vmem:[%s1 + $0x14] sm:$0xf]
    %v38 = vld [vmem:[%s1 + $0x18] sm:$0xf]
    %v39 = vld [vmem:[%s1 + $0x1c] sm:$0xf]
    %v40 = vld [vmem:[%s1 + $0x20] sm:$0xf]
    %v41 = vld [vmem:[%s1 + $0x24] sm:$0xf]
    %v42 = vld [vmem:[%s1 + $0x28] sm:$0xf]
    %v43 = vld [vmem:[%s1 + $0x2c] sm:$0xf]
    %v44 = vld [vmem:[%s1 + $0x30] sm:$0xf]
    %v45 = vld [vmem:[%s1 + $0x34] sm:$0xf]
    %v46 = vld [vmem:[%s1 + $0x38] sm:$0xf]
    %v47 = vld [vmem:[%s1 + $0x3c] sm:$0xf]
    %v48 = vld [vmem:[%s1 + $0x40] sm:$0xf]
    %v49 = vld [vmem:[%s1 + $0x44] sm:$0xf]
    %v50 = vld [vmem:[%s1 + $0x48] sm:$0x3]
    %v67 = vunpack.c.l.b16 %v16
    %v68 = vunpack.c.h.b16 %v16
    %v69 = vunpack.c.l.b16 %v17
    %v70 = vunpack.c.h.b16 %v17
    %v71 = vunpack.c.l.b16 %v18
    %v72 = vunpack.c.h.b16 %v18
    %v73 = vunpack.c.l.b16 %v19
    %v74 = vunpack.c.h.b16 %v19
    %v75 = vunpack.c.l.b16 %v20
    %v76 = vunpack.c.h.b16 %v20
    %v77 = vunpack.c.l.b16 %v21
    %v78 = vunpack.c.h.b16 %v21
    %v79 = vunpack.c.l.b16 %v22
    %v80 = vunpack.c.h.b16 %v22
    %v81 = vunpack.c.l.b16 %v23
    %v82 = vunpack.c.h.b16 %v23
    %v83 = vunpack.c.l.b16 %v24
    %v84 = vunpack.c.h.b16 %v24
    %v85 = vunpack.c.l.b16 %v25
    %v86 = vunpack.c.h.b16 %v25
    %v87 = vunpack.c.l.b16 %v26
    %v88 = vunpack.c.h.b16 %v26
    %v89 = vunpack.c.l.b16 %v27
    %v90 = vunpack.c.h.b16 %v27
    %v91 = vunpack.c.l.b16 %v28
    %v92 = vunpack.c.h.b16 %v28
    %v93 = vunpack.c.l.b16 %v29
    %v94 = vunpack.c.h.b16 %v29
    %v95 = vunpack.c.l.b16 %v30
    %v96 = vunpack.c.h.b16 %v30
    %v97 = vunpack.c.l.b16 %v31
    %v98 = vunpack.c.h.b16 %v31
    %v99 = vpack.c.b16 %v69, %v67
    %v100 = vpack.c.b16 %v70, %v68
    %v101 = vpack.c.b16 %v73, %v71
    %v102 = vpack.c.b16 %v74, %v72
    %v103 = vpack.c.b16 %v77, %v75
    %v104 = vpack.c.b16 %v78, %v76
    %v105 = vpack.c.b16 %v81, %v79
    %v106 = vpack.c.b16 %v82, %v80
    %v107 = vpack.c.b16 %v85, %v83
    %v108 = vpack.c.b16 %v86, %v84
    %v109 = vpack.c.b16 %v89, %v87
    %v110 = vpack.c.b16 %v90, %v88
    %v111 = vpack.c.b16 %v93, %v91
    %v112 = vpack.c.b16 %v94, %v92
    %v113 = vpack.c.b16 %v97, %v95
    %v114 = vpack.c.b16 %v98, %v96
    %v142 = vunpack.c.l.b16 %v32
    %v143 = vunpack.c.l.b16 %v33
    %v144 = vunpack.c.l.b16 %v34
    %v145 = vunpack.c.l.b16 %v35
    %v146 = vunpack.c.l.b16 %v36
    %v147 = vunpack.c.l.b16 %v37
    %v148 = vunpack.c.l.b16 %v38
    %v149 = vunpack.c.l.b16 %v39
    %v150 = vunpack.c.l.b16 %v40
    %v151 = vunpack.c.l.b16 %v41
    %v152 = vunpack.c.l.b16 %v42
    %v153 = vunpack.c.l.b16 %v43
    %v154 = vunpack.c.l.b16 %v44
    %v155 = vunpack.c.l.b16 %v45
    %v156 = vunpack.c.l.b16 %v46
    %v157 = vunpack.c.l.b16 %v47
    %v158 = vunpack.c.l.b16 %v48
    %v159 = vunpack.c.l.b16 %v49
    %v160 = vunpack.c.l.b16 %v50
    %v161 = vpack.c.b16 %v143, %v142
    %v162 = vpack.c.b16 %v145, %v144
    %v163 = vpack.c.b16 %v147, %v146
    %v164 = vpack.c.b16 %v149, %v148
    %v165 = vpack.c.b16 %v151, %v150
    %v166 = vpack.c.b16 %v153, %v152
    %v167 = vpack.c.b16 %v155, %v154
    %v168 = vpack.c.b16 %v157, %v156
    %v169 = vpack.c.b16 %v159, %v158
    %v170 = vpack.c.b16 %v160, %v160
    %vm180 = vcmask 154624
    %v182 = vsel %vm180, %v100, 0
    %v185 = vsel %vm180, %v102, 0
    %v188 = vsel %vm180, %v104, 0
    %v191 = vsel %vm180, %v106, 0
    %v194 = vsel %vm180, %v108, 0
    %v197 = vsel %vm180, %v110, 0
    %v200 = vsel %vm180, %v112, 0
    %v203 = vsel %vm180, %v114, 0
    %vm205 = vcmask 1040384
    %vm206 = vcmask 1041408
    %v207 = vsel %vm205, 4294967295, 65535
    %v208 = vsel %vm206, %v207, 0
    %v210 = vand.u32 %v170, %v208
    %212 = vmatprep.subr.bf16.mxu0 0
    %213 = vmatpush1.bf16.msra.mxu0 %v161
    %214 = vmatprep.subr.bf16.mxu0 0
    %215 = vmatpush1.bf16.msra.mxu0 %v162
    %216 = vmatprep.subr.bf16.mxu0 0
    %217 = vmatpush1.bf16.msra.mxu0 %v163
    %218 = vmatprep.subr.bf16.mxu0 0
    %219 = vmatpush1.bf16.msra.mxu0 %v164
    %220 = vmatprep.subr.bf16.mxu0 0
    %221 = vmatpush1.bf16.msra.mxu0 %v165
    %222 = vmatprep.subr.bf16.mxu0 0
    %223 = vmatpush1.bf16.msra.mxu0 %v166
    %224 = vmatprep.subr.bf16.mxu0 0
    %225 = vmatpush1.bf16.msra.mxu0 %v167
    %226 = vmatprep.subr.bf16.mxu0 0
    %227 = vmatpush1.bf16.msra.mxu0 %v168
    %228 = vmatprep.subr.bf16.mxu0 0
    %229 = vmatpush1.bf16.msra.mxu0 %v169
    %230 = vmatprep.subr.bf16.mxu0 0
    %231 = vmatpush1.bf16.msra.mxu0 %v210
    %232 = vmatprep.subr.bf16.mxu0 0
    %233 = vmatpush1.bf16.msra.mxu0 0
    %234 = vmatprep.subr.bf16.mxu0 0
    %235 = vmatpush1.bf16.msra.mxu0 0
    %236 = vmatprep.subr.bf16.mxu0 0
    %237 = vmatpush1.bf16.msra.mxu0 0
    %238 = vmatprep.subr.bf16.mxu0 0
    %239 = vmatpush1.bf16.msra.mxu0 0
    %240 = vmatprep.subr.bf16.mxu0 0
    %241 = vmatpush1.bf16.msra.mxu0 0
    %242 = vmatprep.subr.bf16.mxu0 0
    %243 = vmatpush1.bf16.msra.mxu0 0
    %244 = vmatprep.mubr.bf16.mxu0 %v182
    %245 = vmatmul.mubr.bf16.gmra.mrb[0].mxu0 %v99
    %v246 = vpop.f32.mrb[0].mxu0
    %v247 = vadd.f32 0.0, %v246
    %v248 = vpop.f32.mrb[0].mxu0
    %v249 = vpop.f32.mrb[0].mxu0
    %v250 = vadd.f32 0.0, %v249
    %v251 = vpop.f32.mrb[0].mxu0
    %252 = vmatprep.mubr.bf16.mxu0 %v185
    %253 = vmatmul.mubr.bf16.gmra.mrb[0].mxu0 %v101
    %v254 = vpop.f32.mrb[0].mxu0
    %v255 = vadd.f32 0.0, %v254
    %v256 = vpop.f32.mrb[0].mxu0
    %v257 = vpop.f32.mrb[0].mxu0
    %v258 = vadd.f32 0.0, %v257
    %v259 = vpop.f32.mrb[0].mxu0
    %260 = vmatprep.mubr.bf16.mxu0 %v188
    %261 = vmatmul.mubr.bf16.gmra.mrb[0].mxu0 %v103
    %v262 = vpop.f32.mrb[0].mxu0
    %v263 = vadd.f32 0.0, %v262
    %v264 = vpop.f32.mrb[0].mxu0
    %v265 = vpop.f32.mrb[0].mxu0
    %v266 = vadd.f32 0.0, %v265
    %v267 = vpop.f32.mrb[0].mxu0
    %268 = vmatprep.mubr.bf16.mxu0 %v191
    %269 = vmatmul.mubr.bf16.gmra.mrb[0].mxu0 %v105
    %v270 = vpop.f32.mrb[0].mxu0
    %v271 = vadd.f32 0.0, %v270
    %v272 = vpop.f32.mrb[0].mxu0
    %v273 = vpop.f32.mrb[0].mxu0
    %v274 = vadd.f32 0.0, %v273
    %v275 = vpop.f32.mrb[0].mxu0
    %276 = vmatprep.mubr.bf16.mxu0 %v194
    %277 = vmatmul.mubr.bf16.gmra.mrb[0].mxu0 %v107
    %v278 = vpop.f32.mrb[0].mxu0
    %v279 = vadd.f32 0.0, %v278
    %v280 = vpop.f32.mrb[0].mxu0
    %v281 = vpop.f32.mrb[0].mxu0
    %v282 = vadd.f32 0.0, %v281
    %v283 = vpop.f32.mrb[0].mxu0
    %284 = vmatprep.mubr.bf16.mxu0 %v197
    %285 = vmatmul.mubr.bf16.gmra.mrb[0].mxu0 %v109
    %v286 = vpop.f32.mrb[0].mxu0
    %v287 = vadd.f32 0.0, %v286
    %v288 = vpop.f32.mrb[0].mxu0
    %v289 = vpop.f32.mrb[0].mxu0
    %v290 = vadd.f32 0.0, %v289
    %v291 = vpop.f32.mrb[0].mxu0
    %292 = vmatprep.mubr.bf16.mxu0 %v200
    %293 = vmatmul.mubr.bf16.gmra.mrb[0].mxu0 %v111
    %v294 = vpop.f32.mrb[0].mxu0
    %v295 = vadd.f32 0.0, %v294
    %v296 = vpop.f32.mrb[0].mxu0
    %v297 = vpop.f32.mrb[0].mxu0
    %v298 = vadd.f32 0.0, %v297
    %v299 = vpop.f32.mrb[0].mxu0
    %300 = vmatprep.mubr.bf16.mxu0 %v203
    %301 = vmatmul.mubr.bf16.gmra.mrb[0].mxu0 %v113
    %v302 = vpop.f32.mrb[0].mxu0
    %v303 = vadd.f32 0.0, %v302
    %v304 = vpop.f32.mrb[0].mxu0
    %v305 = vpop.f32.mrb[0].mxu0
    %v306 = vadd.f32 0.0, %v305
    %v307 = vpop.f32.mrb[0].mxu0
    %308 = vdwg.mxu0
    %v309 = vpack.c.bf16 %v250, %v247
    %v310 = vpack.c.bf16 %v258, %v255
    %v311 = vpack.c.bf16 %v266, %v263
    %v312 = vpack.c.bf16 %v274, %v271
    %v313 = vpack.c.bf16 %v282, %v279
    %v314 = vpack.c.bf16 %v290, %v287
    %v315 = vpack.c.bf16 %v298, %v295
    %v316 = vpack.c.bf16 %v306, %v303
    %v325 = vunpack.c.l.b16 %v309
    %v326 = vunpack.c.h.b16 %v309
    %v327 = vunpack.c.l.b16 %v310
    %v328 = vunpack.c.h.b16 %v310
    %v329 = vunpack.c.l.b16 %v311
    %v330 = vunpack.c.h.b16 %v311
    %v331 = vunpack.c.l.b16 %v312
    %v332 = vunpack.c.h.b16 %v312
    %v333 = vunpack.c.l.b16 %v313
    %v334 = vunpack.c.h.b16 %v313
    %v335 = vunpack.c.l.b16 %v314
    %v336 = vunpack.c.h.b16 %v314
    %v337 = vunpack.c.l.b16 %v315
    %v338 = vunpack.c.h.b16 %v315
    %v339 = vunpack.c.l.b16 %v316
    %v340 = vunpack.c.h.b16 %v316
    %v341 = vpack.c.b16 %v325, %v325
    %v342 = vpack.c.b16 %v326, %v326
    %v343 = vpack.c.b16 %v327, %v327
    %v344 = vpack.c.b16 %v328, %v328
    %v345 = vpack.c.b16 %v329, %v329
    %v346 = vpack.c.b16 %v330, %v330
    %v347 = vpack.c.b16 %v331, %v331
    %v348 = vpack.c.b16 %v332, %v332
    %v349 = vpack.c.b16 %v333, %v333
    %v350 = vpack.c.b16 %v334, %v334
    %v351 = vpack.c.b16 %v335, %v335
    %v352 = vpack.c.b16 %v336, %v336
    %v353 = vpack.c.b16 %v337, %v337
    %v354 = vpack.c.b16 %v338, %v338
    %v355 = vpack.c.b16 %v339, %v339
    %v356 = vpack.c.b16 %v340, %v340
    %373 = vst [vmem:[#allocation2] sm:$0xf] %v341
    %374 = vst [vmem:[#allocation2 + $0x4] sm:$0xf] %v342
    %375 = vst [vmem:[#allocation2 + $0x8] sm:$0xf] %v343
    %376 = vst [vmem:[#allocation2 + $0xc] sm:$0xf] %v344
    %377 = vst [vmem:[#allocation2 + $0x10] sm:$0xf] %v345
    %378 = vst [vmem:[#allocation2 + $0x14] sm:$0xf] %v346
    %379 = vst [vmem:[#allocation2 + $0x18] sm:$0xf] %v347
    %380 = vst [vmem:[#allocation2 + $0x1c] sm:$0xf] %v348
    %381 = vst [vmem:[#allocation2 + $0x20] sm:$0xf] %v349
    %382 = vst [vmem:[#allocation2 + $0x24] sm:$0xf] %v350
    %383 = vst [vmem:[#allocation2 + $0x28] sm:$0xf] %v351
    %384 = vst [vmem:[#allocation2 + $0x2c] sm:$0xf] %v352
    %385 = vst [vmem:[#allocation2 + $0x30] sm:$0xf] %v353
    %386 = vst [vmem:[#allocation2 + $0x34] sm:$0xf] %v354
    %387 = vst [vmem:[#allocation2 + $0x38] sm:$0xf] %v355
    %388 = vst [vmem:[#allocation2 + $0x3c] sm:$0xf] %v356
    %v389 = vadd.f32 %v247, %v250
    %v390 = vadd.f32 %v389, %v255
    %v391 = vadd.f32 %v390, %v258
    %v392 = vadd.f32 %v391, %v263
    %v393 = vadd.f32 %v392, %v266
    %v394 = vadd.f32 %v393, %v271
    %v395 = vadd.f32 %v394, %v274
    %v396 = vadd.f32 %v395, %v279
    %v397 = vadd.f32 %v396, %v282
    %v398 = vadd.f32 %v397, %v287
    %v399 = vadd.f32 %v398, %v290
    %v400 = vadd.f32 %v399, %v295
    %v401 = vadd.f32 %v400, %v298
    %v402 = vadd.f32 %v401, %v303
    %v403 = vadd.f32 %v402, %v306
    %v404 = vrot.slane %v403, 4
    %v405 = vadd.f32 %v403, %v404
    %v406 = vrot.slane %v405, 2
    %v407 = vadd.f32 %v405, %v406
    %v408 = vrot.slane %v407, 1
    %v409 = vadd.f32 %v407, %v408
    %410 = vst [vmem:[#allocation4] sm:$0x1] %v409
    %v411 = vmul.f32 %v247, %v247
    %v412 = vmul.f32 %v250, %v250
    %v413 = vmul.f32 %v255, %v255
    %v414 = vmul.f32 %v258, %v258
    %v415 = vmul.f32 %v263, %v263
    %v416 = vmul.f32 %v266, %v266
    %v417 = vmul.f32 %v271, %v271
    %v418 = vmul.f32 %v274, %v274
    %v419 = vmul.f32 %v279, %v279
    %v420 = vmul.f32 %v282, %v282
    %v421 = vmul.f32 %v287, %v287
    %v422 = vmul.f32 %v290, %v290
    %v423 = vmul.f32 %v295, %v295
    %v424 = vmul.f32 %v298, %v298
    %v425 = vmul.f32 %v303, %v303
    %v426 = vmul.f32 %v306, %v306
    %v427 = vadd.f32 %v411, %v412
    %v428 = vadd.f32 %v427, %v413
    %v429 = vadd.f32 %v428, %v414
    %v430 = vadd.f32 %v429, %v415
    %v431 = vadd.f32 %v430, %v416
    %v432 = vadd.f32 %v431, %v417
    %v433 = vadd.f32 %v432, %v418
    %v434 = vadd.f32 %v433, %v419
    %v435 = vadd.f32 %v434, %v420
    %v436 = vadd.f32 %v435, %v421
    %v437 = vadd.f32 %v436, %v422
    %v438 = vadd.f32 %v437, %v423
    %v439 = vadd.f32 %v438, %v424
    %v440 = vadd.f32 %v439, %v425
    %v441 = vadd.f32 %v440, %v426
    %v442 = vrot.slane %v441, 4
    %v443 = vadd.f32 %v441, %v442
    %v444 = vrot.slane %v443, 2
    %v445 = vadd.f32 %v443, %v444
    %v446 = vrot.slane %v445, 1
    %v447 = vadd.f32 %v445, %v446
    %448 = vst [vmem:[#allocation4 + $0x1] sm:$0x1] %v447
    // Predicated region
    $region10: #{tpu_custom_call.1} parent=1 // pred_check
      _
    $region11: #{tpu_custom_call.1} parent=1 // pred_check_branch
      %450 = sbr.rel (0) target = $region13
    $region12: #{tpu_custom_call.1} parent=1 // pred_region
      %s452 = ssub.s32 1024, 1024
      %453 = vsyncadd [#allocation3], %s452
      %s454 = sshll.u32 [#allocation2], 4
      %s455 = int_to_ptr.vmem [resolvable:$true] %s454
      %460 = dma.vmem_to_hbm [thread:$0]  %s455, 1024, %s2, [#allocation3], 64, 64, 4
    $region13: #{tpu_custom_call.1} parent=1 // pred_fallthru
      _
    // Predicated region
    $region14: #{tpu_custom_call.1} parent=1 // pred_check
      _
    $region15: #{tpu_custom_call.1} parent=1 // pred_check_branch
      %462 = sbr.rel (0) target = $region17
    $region16: #{tpu_custom_call.1} parent=1 // pred_region
      %s464 = ssub.s32 32, 32
      %465 = vsyncadd [#allocation5], %s464
      %s467 = sshll.u32 [#allocation4], 4
      %s468 = int_to_ptr.vmem [resolvable:$true] %s467
      %470 = dma.vmem_to_hbm [thread:$0]  %s468, 32, %s3, [#allocation5]
    $region17: #{tpu_custom_call.1} parent=1 // pred_fallthru
      _
    // Predicated region
    $region18: #{tpu_custom_call.1} parent=1 // pred_check
      _
    $region19: #{tpu_custom_call.1} parent=1 // pred_check_branch
      %472 = sbr.rel (0) target = $region21
    $region20: #{tpu_custom_call.1} parent=1 // pred_region
      %473 = dma.done [#allocation3], 1024
    $region21: #{tpu_custom_call.1} parent=1 // pred_fallthru
      _
    // Predicated region
    $region22: #{tpu_custom_call.1} parent=1 // pred_check
      _
    $region23: #{tpu_custom_call.1} parent=1 // pred_check_branch
      %475 = sbr.rel (0) target = $region25
    $region24: #{tpu_custom_call.1} parent=1 // pred_region
      %476 = dma.done [#allocation5], 32
    $region25: #{tpu_custom_call.1} parent=1 // pred_fallthru
      _
    %477 = vsyncpa [#allocation3], 1
    %478 = vsyncpa [#allocation5], 1

</llo_original>
